<compile_context>
chip_gen: v7x
topology: tpu7x:2x2x1
jax: 0.10.0
libtpu: 0.0.40
codegen_flags: <defaults>
</compile_context>

<pallas_src>
import functools
import math

import jax
import jax.numpy as jnp
from jax.experimental import pallas as pl
from jax.experimental.pallas import tpu as pltpu


_DEFAULT_TARGET_BLOCK_BYTES = 2 << 20  # ~2 MiB per input block (x2 buffers x in/out ≈ 8 MiB)


def _round_down(x, m):
    return (x // m) * m


def _choose_tiles(batch, feat, itemsize, target_bytes):
    """Pick (batch_tile, lane_tile) so one block is ~target_bytes and layout-legal.

    Legality: second-to-last block dim is a multiple of 8 or equal to the full batch dim;
    last block dim is a multiple of 128 or equal to the full feature dim.
    """
    row_bytes = max(1, feat * itemsize)
    if batch <= 8:
        bt = batch                                   # "equal to full dim" is always legal
    else:
        by_bytes = max(8, _round_down(target_bytes // row_bytes, 8))
        bt = min(by_bytes, _round_down(batch, 8))    # multiple of 8; ragged tail via cdiv
    if bt * row_bytes <= target_bytes or feat <= 128:
        tl = feat                                    # full feature dim (covers feat % 128 != 0)
    else:
        # Single sample too big -> tile the lane axis in multiples of 128 (ragged tail OK).
        tl = max(128, _round_down(target_bytes // (bt * itemsize), 128))
    return bt, tl


def _drop_path_kernel(x_ref, scale_ref, o_ref):
    # Multiply in f32 (so 1/keep_prob is not rounded to bf16); cast back only on the store.
    o_ref[...] = (x_ref[...].astype(jnp.float32) * scale_ref[...]).astype(o_ref.dtype)


def _drop_path_add_kernel(x_ref, res_ref, scale_ref, o_ref):
    y = x_ref[...].astype(jnp.float32) * scale_ref[...] + res_ref[...].astype(jnp.float32)
    o_ref[...] = y.astype(o_ref.dtype)


def _launch(kernel, data_2d, scale, batch, feat, dtype, *, n_data, target_bytes):
    itemsize = jnp.dtype(dtype).itemsize
    bt, tl = _choose_tiles(batch, feat, itemsize, target_bytes)
    grid = (pl.cdiv(batch, bt), pl.cdiv(feat, tl))

    data_spec = pl.BlockSpec((bt, tl), lambda i, j: (i, j))
    scale_spec = pl.BlockSpec((bt, 1), lambda i, j: (i, 0))   # mask depends only on batch row
    block_bytes = bt * tl * itemsize

    return pl.pallas_call(
        kernel,
        out_shape=jax.ShapeDtypeStruct((batch, feat), dtype),
        grid=grid,
        in_specs=[data_spec] * n_data + [scale_spec],
        out_specs=data_spec,
        compiler_params=pltpu.CompilerParams(
            # No accumulator anywhere -> both axes parallel (lets v7x shard across its 2 TCs).
            dimension_semantics=("parallel", "parallel"),
            # in(s) + out, double-buffered, with ~2x headroom; blocks are capped at ~2 MiB so
            # this stays well under v5e's scoped limit and v7x's 64 MiB physical VMEM.
            vmem_limit_bytes=int(max(4 * (n_data + 1) * block_bytes, 8 << 20)),
        ),
        cost_estimate=pl.CostEstimate(
            flops=n_data * batch * feat,
            transcendentals=0,
            bytes_accessed=(n_data + 1) * batch * feat * itemsize),
    )(*data_2d, scale)


def _drop_path_scale(key, batch, keep_prob):
    """Per-sample scale: floor(keep_prob + U[0,1)) / keep_prob, shape (batch, 1), f32."""
    u = jax.random.uniform(key, (batch, 1), dtype=jnp.float32)
    return jnp.floor(keep_prob + u) * (1.0 / keep_prob)


def drop_path_forward(x, *, drop_prob, key, training=True,
                      target_block_bytes=_DEFAULT_TARGET_BLOCK_BYTES):
    """DropPath forward. Identity when drop_prob == 0 or not training (no kernel launch)."""
    if drop_prob == 0.0 or not training:
        return x
    assert 0.0 < drop_prob < 1.0, "drop_prob must lie in [0, 1)"
    keep_prob = 1.0 - drop_prob

    batch = x.shape[0]
    feat = int(math.prod(x.shape[1:]))
    x2 = x.reshape(batch, feat)                      # lane-dense slab (wrapper-side plumbing)
    scale = _drop_path_scale(key, batch, keep_prob)

    out2 = _launch(_drop_path_kernel, (x2,), scale, batch, feat, x.dtype,
                   n_data=1, target_bytes=target_block_bytes)
    return out2.reshape(x.shape)


def drop_path_add_forward(x, residual, *, drop_prob, key, training=True,
                          target_block_bytes=_DEFAULT_TARGET_BLOCK_BYTES):
    """Fused `residual + drop_path(x)` — the pattern DropPath is always used in."""
    assert x.shape == residual.shape and x.dtype == residual.dtype
    if drop_prob == 0.0 or not training:
        return residual + x
    assert 0.0 < drop_prob < 1.0
    keep_prob = 1.0 - drop_prob

    batch = x.shape[0]
    feat = int(math.prod(x.shape[1:]))
    scale = _drop_path_scale(key, batch, keep_prob)

    out2 = _launch(_drop_path_add_kernel,
                   (x.reshape(batch, feat), residual.reshape(batch, feat)),
                   scale, batch, feat, x.dtype,
                   n_data=2, target_bytes=target_block_bytes)
    return out2.reshape(x.shape)


def _drop_path_ref(x, drop_prob, key):
    """Pure-JAX reference using the identical per-sample draw."""
    keep_prob = 1.0 - drop_prob
    batch = x.shape[0]
    scale = _drop_path_scale(key, batch, keep_prob)
    y = x.reshape(batch, -1).astype(jnp.float32) * scale
    return y.astype(x.dtype).reshape(x.shape)


if __name__ == "__main__":
    B, N, C = 2, 8, 32                       # (batch, tokens, channels) — typical DropPath input
    drop_prob = 0.25
    keep_prob = 1.0 - drop_prob

    root = jax.random.PRNGKey(0)
    kx, kmask, kres = jax.random.split(root, 3)
    x = jax.random.normal(kx, (B, N, C), dtype=jnp.float32)

    # --- training path (kernel) vs. reference + structural check ---
    out = jax.block_until_ready(drop_path_forward(x, drop_prob=drop_prob, key=kmask))
    assert out.shape == x.shape
    assert jnp.allclose(out, _drop_path_ref(x, drop_prob, kmask), atol=1e-6, rtol=1e-6)
    y = out.reshape(B, -1)
    expect = x.reshape(B, -1) / keep_prob
    dropped = jnp.all(y == 0.0, axis=1)
    kept = jnp.all(jnp.abs(y - expect) <= 1e-5 * (1.0 + jnp.abs(expect)), axis=1)
    assert bool(jnp.all(dropped | kept)), "sample not cleanly dropped or rescaled"

    # --- identity paths, matching the PyTorch early-return ---
    assert bool(jnp.array_equal(
        drop_path_forward(x, drop_prob=drop_prob, key=kmask, training=False), x))
    assert bool(jnp.array_equal(drop_path_forward(x, drop_prob=0.0, key=kmask), x))

    # --- ragged batch (B % 8 != 0): exercises cdiv grid + masked tail block ---
    xb = jax.random.normal(jax.random.PRNGKey(1), (10, N, C), dtype=jnp.float32)
    kb = jax.random.PRNGKey(7)
    ob = jax.block_until_ready(drop_path_forward(xb, drop_prob=0.5, key=kb))
    assert jnp.allclose(ob, _drop_path_ref(xb, 0.5, kb), atol=1e-6, rtol=1e-6)

    # --- small target block bytes: exercises the 2-D (batch-tile, lane-tile) grid ---
    xt = jax.random.normal(jax.random.PRNGKey(3), (16, 4, 1024), dtype=jnp.float32)
    kt = jax.random.PRNGKey(11)
    ot = jax.block_until_ready(
        drop_path_forward(xt, drop_prob=0.3, key=kt, target_block_bytes=32 * 1024))
    assert jnp.allclose(ot, _drop_path_ref(xt, 0.3, kt), atol=1e-6, rtol=1e-6)

    # --- fused residual + drop_path(x) ---
    res = jax.random.normal(kres, (B, N, C), dtype=jnp.float32)
    of = jax.block_until_ready(
        drop_path_add_forward(x, res, drop_prob=drop_prob, key=kmask))
    assert jnp.allclose(of, res + _drop_path_ref(x, drop_prob, kmask), atol=1e-5, rtol=1e-5)

    # --- bf16 input: multiply happens in f32, only the final store rounds ---
    xh = x.astype(jnp.bfloat16)
    oh = jax.block_until_ready(drop_path_forward(xh, drop_prob=drop_prob, key=kmask))
    assert jnp.allclose(oh.astype(jnp.float32),
                        _drop_path_ref(xh, drop_prob, kmask).astype(jnp.float32),
                        atol=1e-2, rtol=1e-2)

    print("KERNEL_OK")
</pallas_src>

<mosaic_0001>
module attributes {stable_mosaic.version = 11 : i64} {
  func.func @_drop_path_kernel(%arg0: i32, %arg1: i32, %arg2: memref<2x256xf32, #tpu.memory_space<vmem>>, %arg3: memref<2x1xf32, #tpu.memory_space<vmem>>, %arg4: memref<2x256xf32, #tpu.memory_space<vmem>>) attributes {dimension_semantics = [#tpu.dimension_semantics<parallel>, #tpu.dimension_semantics<parallel>], iteration_bounds = array<i64: 1, 1>, scalar_prefetch = 0 : i64, scratch_operands = 0 : i64, tpu.core_type = #tpu.core_type<tc>, window_params = [{transform_indices = @transform_0, window_bounds = array<i64: 2, 256>}, {transform_indices = @transform_1, window_bounds = array<i64: 2, 1>}, {transform_indices = @transform_2, window_bounds = array<i64: 2, 256>}]} {
    %c0 = arith.constant 0 : index
    %c0_0 = arith.constant 0 : index
    %0 = vector.load %arg2[%c0, %c0_0] : memref<2x256xf32, #tpu.memory_space<vmem>>, vector<2x256xf32>
    %c0_1 = arith.constant 0 : index
    %c0_2 = arith.constant 0 : index
    %1 = vector.load %arg3[%c0_1, %c0_2] : memref<2x1xf32, #tpu.memory_space<vmem>>, vector<2x1xf32>
    %2 = vector.broadcast %1 : vector<2x1xf32> to vector<2x256xf32>
    %3 = arith.mulf %0, %2 : vector<2x256xf32>
    %c0_3 = arith.constant 0 : index
    %c0_4 = arith.constant 0 : index
    %4 = vector.load %arg4[%c0_3, %c0_4] : memref<2x256xf32, #tpu.memory_space<vmem>>, vector<2x256xf32>
    tpu.vector_store %arg4[%c0_3, %c0_4], %3 {strides = array<i32>} : memref<2x256xf32, #tpu.memory_space<vmem>>, vector<2x256xf32>,
    return
  }
  func.func @transform_0(%arg0: i32, %arg1: i32) -> (i32, i32) {
    %c0_i32 = arith.constant 0 : i32
    return %arg0, %arg1 : i32, i32
  }
  func.func @transform_1(%arg0: i32, %arg1: i32) -> (i32, i32) {
    %c0_i32 = arith.constant 0 : i32
    %c0_i32_0 = arith.constant 0 : i32
    return %arg0, %c0_i32 : i32, i32
  }
  func.func @transform_2(%arg0: i32, %arg1: i32) -> (i32, i32) {
    %c0_i32 = arith.constant 0 : i32
    return %arg0, %arg1 : i32, i32
  }
}

</mosaic_0001>

<llo_original>
// kernel: tpu_custom_call.1
$region0: #{tpu_custom_call.1}
  #allocation0 [shape = 'u32[]', space=smem, size = 0x4, offset = 0x4, fixed_abs, tag = 'smem constant byte address 0x4 - core index']
  #allocation1 [shape = 'u32[144,128]{1,0:T(1,128)}', space=vmem, size = 0x12000, scoped, tag = 'internal scratch']
  %s0 = inlined_call_operand.hbm [shape: f32[2,256], index: 0, kind: input, shape index: {}]
  %s1 = inlined_call_operand.vmem [shape: f32[2,1], index: 1, kind: input, shape index: {}]
  %s2 = inlined_call_operand.hbm [shape: f32[2,256], index: 2, kind: output, shape index: {}]
  %s3 = sld [smem:[#allocation0]]
  $region22: #{tpu_custom_call.1} parent=0
    _
  %s5 = ssub.s32 1, %s3
  %s6 = scalar_select 0, %s5, %s3
  $region1: #{tpu_custom_call.1} parent=0
    #allocation2 [shape = 'u8[2048]{0}', space=vmem, size = 0x800, scoped, tag = 'input window, operand 0, single buffered']
    #allocation3 [shape = 's32[1]{0}', space=sflag, size = 0x4, scoped, tag = 'scoped memory for tpu_custom_call.1']
    #allocation4 [shape = 's32[1]{0}', space=sflag, size = 0x4, scoped, tag = 'scoped memory for tpu_custom_call.1']
    #allocation5 [shape = 'u8[2048]{0}', space=vmem, size = 0x800, scoped, tag = 'output window, operand 0, single buffered']
    %7 = vsyncpa [#allocation3], 0
    %8 = vsyncpa [#allocation4], 0
    // Predicated region
    $region2: #{tpu_custom_call.1} parent=1 // pred_check
      _
    $region3: #{tpu_custom_call.1} parent=1 // pred_check_branch
      %10 = sbr.rel (0) target = $region5
    $region4: #{tpu_custom_call.1} parent=1 // pred_region
      %s12 = ssub.s32 64, 64
      %13 = vsyncadd [#allocation3], %s12
      %s15 = sshll.u32 [#allocation2], 4
      %s16 = int_to_ptr.vmem [resolvable:$true] %s15
      %18 = dma.hbm_to_vmem [thread:$0]  %s0, 64, %s16, [#allocation3]
    $region5: #{tpu_custom_call.1} parent=1 // pred_fallthru
      _
    // Predicated region
    $region6: #{tpu_custom_call.1} parent=1 // pred_check
      _
    $region7: #{tpu_custom_call.1} parent=1 // pred_check_branch
      %20 = sbr.rel (0) target = $region9
    $region8: #{tpu_custom_call.1} parent=1 // pred_region
      _
    $region9: #{tpu_custom_call.1} parent=1 // pred_fallthru
      _
    // Predicated region
    $region10: #{tpu_custom_call.1} parent=1 // pred_check
      _
    $region11: #{tpu_custom_call.1} parent=1 // pred_check_branch
      %22 = sbr.rel (0) target = $region13
    $region12: #{tpu_custom_call.1} parent=1 // pred_region
      %23 = dma.done [#allocation3], 64
    $region13: #{tpu_custom_call.1} parent=1 // pred_fallthru
      _
    %v24 = vld [vmem:[#allocation2] sm:$0xf]
    %v25 = vld [vmem:[%s1] sm:$0x3]
    %27 = vset.pattern.permute.xlu0 0
    %28 = vperm.xlu0 %27, %v25
    %v29 = vpop.permute.xlu0 %28
    %v31 = vunpack.c.l.s4 269488144
    %v32 = vunpack.c.0.s8 %v31
    %v33 = vlaneseq
    %v34 = vshrl.u32 %v33, 7
    %v35 = vsub.s32 %v32, %v34
    %v36 = vrot.slane %v29, %v35
    %v38 = vmul.f32 %v24, %v36
    %39 = vst [vmem:[#allocation5] sm:$0xf] %v38
    // Predicated region
    $region14: #{tpu_custom_call.1} parent=1 // pred_check
      _
    $region15: #{tpu_custom_call.1} parent=1 // pred_check_branch
      %41 = sbr.rel (0) target = $region17
    $region16: #{tpu_custom_call.1} parent=1 // pred_region
      %s43 = ssub.s32 64, 64
      %44 = vsyncadd [#allocation4], %s43
      %s46 = sshll.u32 [#allocation5], 4
      %s47 = int_to_ptr.vmem [resolvable:$true] %s46
      %49 = dma.vmem_to_hbm [thread:$0]  %s47, 64, %s2, [#allocation4]
    $region17: #{tpu_custom_call.1} parent=1 // pred_fallthru
      _
    // Predicated region
    $region18: #{tpu_custom_call.1} parent=1 // pred_check
      _
    $region19: #{tpu_custom_call.1} parent=1 // pred_check_branch
      %51 = sbr.rel (0) target = $region21
    $region20: #{tpu_custom_call.1} parent=1 // pred_region
      %52 = dma.done [#allocation4], 64
    $region21: #{tpu_custom_call.1} parent=1 // pred_fallthru
      _
    %53 = vsyncpa [#allocation3], 1
    %54 = vsyncpa [#allocation4], 1

</llo_original>
